<compile_context>
chip_gen: v7x
topology: tpu7x:2x2x1
jax: 0.10.0
libtpu: 0.0.40
codegen_flags: <defaults>
</compile_context>

<pallas_src>
import functools

import jax
import jax.numpy as jnp
from jax import lax
from jax.experimental import pallas as pl
from jax.experimental.pallas import tpu as pltpu

_SQRT_HALF = 0.7071067811865476
_P = 0.3275911
_A1, _A2, _A3, _A4, _A5 = (0.254829592, -0.284496736, 1.421413741,
                           -1.453152027, 1.061405429)


def _gelu_exact(x):
    """PyTorch nn.GELU() default: 0.5*x*(1+erf(x/sqrt(2))).

    erf via Abramowitz & Stegun 7.1.26 (|abs err| <= 1.5e-7).  The divide is an
    EUP approximate reciprocal + one Newton step (off the 4-wide VALU slot);
    exp also runs on the EUP.  Only ops guaranteed to lower in Mosaic.
    """
    z = x * _SQRT_HALF
    az = jnp.abs(z)
    d = 1.0 + _P * az
    r = pl.reciprocal(d, approx=True)
    t = r * (2.0 - d * r)                       # Newton step -> ~f32-exact 1/d
    poly = ((((_A5 * t + _A4) * t + _A3) * t + _A2) * t + _A1) * t
    q = poly * jnp.exp(-az * az)                # = 1 - erf(|z|)
    cdf2 = jnp.where(z >= 0.0, 2.0 - q, q)      # = 1 + erf(z)
    return 0.5 * x * cdf2


def _ffn_kernel(w1_ref, b1_ref, w2_ref, b2_ref, x_ref, o_ref, *, n_sub, sub):
    # x_ref/o_ref: (C, T) spatial tile of one batch element.  Weights/biases
    # use constant index maps -> resident in VMEM across the whole grid.
    w1 = w1_ref[...]
    b1 = b1_ref[...]
    w2 = w2_ref[...]
    b2 = b2_ref[...]

    def compute(x):
        h = jnp.dot(w1, x, preferred_element_type=jnp.float32) + b1
        h = _gelu_exact(h)
        o = jnp.dot(w2, h.astype(w2.dtype), preferred_element_type=jnp.float32)
        return o + b2

    if n_sub == 1:
        o_ref[...] = compute(x_ref[...]).astype(o_ref.dtype)
    else:
        # Sub-chunk the tile so MXU work on chunk k+1 overlaps GELU of chunk k
        # and erf temporaries stay at (inner, sub) instead of (inner, T).
        def body(i, carry):
            s = pl.multiple_of(i * sub, 128)
            x = x_ref[:, pl.ds(s, sub)]
            o_ref[:, pl.ds(s, sub)] = compute(x).astype(o_ref.dtype)
            return carry

        lax.fori_loop(0, n_sub, body, 0, unroll=True)


def _pick_spatial_tile(hw, c, inner, batch, *, budget_bytes=12 << 20,
                       min_steps=8):
    """Lane-dense (multiple-of-128) spatial tile.

    Capped by a VMEM budget that scales with (C, inner), then shrunk (down to
    128) until the grid has enough steps for v7x's two TensorCores plus
    pipeline depth.  hw is padded up to a multiple of the tile in the wrapper.
    """
    hw128 = -(-hw // 128) * 128
    # f32 bytes per lane column: double-buffered x & out blocks (2*2*C) plus
    # the (inner, sub) MXU result and GELU temporaries (~8*inner, conservative).
    per_lane = 4 * (4 * c + 8 * inner)
    cap = budget_bytes // per_lane
    cap = (cap // 512 * 512) if cap >= 512 else max(128, (cap // 128) * 128)
    t = min(hw128, cap)
    while batch * (-(-hw128 // t)) < min_steps and t > 128:
        t = max(128, ((t // 2) + 127) // 128 * 128)
    return t


def _pick_subchunks(t):
    n128 = t // 128
    for n in (4, 2):
        if n128 % n == 0 and n128 > n:
            return n
    return 1


def conv_feedforward(x, w1, b1, w2, b2, *, compute_dtype=jnp.float32):
    """x: (B, dim, H, W); w1: (inner, dim[,1,1]); b1: (inner,);
    w2: (dim, inner[,1,1]); b2: (dim,).

    compute_dtype=jnp.bfloat16 feeds the MXU bf16 operands (f32 accumulation)
    — recommended on v5e; default f32 matches the PyTorch module bit-for-bit
    intent.
    """
    B, C, H, W = x.shape
    w1 = jnp.asarray(w1).reshape(w1.shape[0], -1)     # (inner, dim)
    w2 = jnp.asarray(w2).reshape(w2.shape[0], -1)     # (dim, inner)
    inner = w1.shape[0]
    HW = H * W

    T = _pick_spatial_tile(HW, C, inner, B)
    HW_pad = pl.cdiv(HW, T) * T
    n_t = HW_pad // T
    n_sub = _pick_subchunks(T)
    sub = T // n_sub

    xf = x.reshape(B, C, HW)
    if HW_pad != HW:
        xf = jnp.pad(xf, ((0, 0), (0, 0), (0, HW_pad - HW)))
    xf = xf.astype(compute_dtype)

    b1c = b1.reshape(inner, 1).astype(jnp.float32)
    b2c = b2.reshape(C, 1).astype(jnp.float32)
    w1c = w1.astype(compute_dtype)
    w2c = w2.astype(compute_dtype)

    # Explicit scoped-VMEM request: double-buffered x/out tiles + resident
    # weights/biases + per-subchunk intermediates, with headroom.  Clamped to
    # [32, 64] MiB so it is valid on every generation (v7x: 64 MiB physical).
    itemsize = jnp.dtype(compute_dtype).itemsize
    est = (2 * 2 * C * T * itemsize                     # x + out blocks
           + 2 * (2 * inner * C * itemsize + (inner + C) * 4)
           + 10 * inner * sub * 4)                      # MXU result + GELU temps
    vmem_limit = int(min(64 << 20, max(32 << 20, est + (8 << 20))))

    kernel = functools.partial(_ffn_kernel, n_sub=n_sub, sub=sub)

    out = pl.pallas_call(
        kernel,
        out_shape=jax.ShapeDtypeStruct((B, C, HW_pad), x.dtype),
        grid_spec=pltpu.PrefetchScalarGridSpec(
            num_scalar_prefetch=0,
            grid=(B, n_t),
            in_specs=[
                pl.BlockSpec((inner, C), lambda b, j: (0, 0)),       # W1 resident
                pl.BlockSpec((inner, 1), lambda b, j: (0, 0)),       # b1 resident
                pl.BlockSpec((C, inner), lambda b, j: (0, 0)),       # W2 resident
                pl.BlockSpec((C, 1), lambda b, j: (0, 0)),           # b2 resident
                pl.BlockSpec((None, C, T), lambda b, j: (b, 0, j)),  # x tile
            ],
            out_specs=pl.BlockSpec((None, C, T), lambda b, j: (b, 0, j)),
        ),
        compiler_params=pltpu.CompilerParams(
            dimension_semantics=("parallel", "parallel"),
            vmem_limit_bytes=vmem_limit),
    )(w1c, b1c, w2c, b2c, xf)

    return out[:, :, :HW].reshape(B, C, H, W)


def _reference(x, w1, b1, w2, b2):
    """Pure-JAX reference matching the PyTorch forward (1x1 convs + exact GELU)."""
    B, C, H, W = x.shape
    xr = x.reshape(B, C, H * W)
    h = jnp.einsum("ic,bcs->bis", w1, xr) + b1[None, :, None]
    h = jax.nn.gelu(h, approximate=False)
    o = jnp.einsum("ci,bis->bcs", w2, h) + b2[None, :, None]
    return o.reshape(B, C, H, W)


def _make_inputs(key, B, dim, H, W, mult=2):
    inner = dim * mult
    k_x, k_w1, k_b1, k_w2, k_b2 = jax.random.split(key, 5)
    x = jax.random.normal(k_x, (B, dim, H, W), dtype=jnp.float32)
    # PyTorch Conv2d default init: U(-1/sqrt(fan_in), 1/sqrt(fan_in)); 1x1
    # kernels stored here already squeezed to (out, in).
    bound1 = 1.0 / (dim ** 0.5)
    w1 = jax.random.uniform(k_w1, (inner, dim), jnp.float32, -bound1, bound1)
    b1 = jax.random.uniform(k_b1, (inner,), jnp.float32, -bound1, bound1)
    bound2 = 1.0 / (inner ** 0.5)
    w2 = jax.random.uniform(k_w2, (dim, inner), jnp.float32, -bound2, bound2)
    b2 = jax.random.uniform(k_b2, (dim,), jnp.float32, -bound2, bound2)
    return x, w1, b1, w2, b2


if __name__ == "__main__":
    key = jax.random.PRNGKey(0)
    k1, k2 = jax.random.split(key)

    # Case 1: small canonical config (single-chunk path, HW multiple of 128).
    x, w1, b1, w2, b2 = _make_inputs(k1, B=2, dim=4, H=16, W=16)
    out = jax.block_until_ready(conv_feedforward(x, w1, b1, w2, b2))
    ref = jax.block_until_ready(_reference(x, w1, b1, w2, b2))
    assert out.shape == x.shape
    assert jnp.allclose(out, ref, atol=1e-4, rtol=1e-4), "mismatch vs reference (case 1)"

    # Case 2: non-multiple-of-128 spatial size -> exercises padding+slicing,
    # the step-count-aware tiling, and the in-kernel sub-chunked path.
    x, w1, b1, w2, b2 = _make_inputs(k2, B=2, dim=8, H=30, W=62)
    out = jax.block_until_ready(conv_feedforward(x, w1, b1, w2, b2))
    ref = jax.block_until_ready(_reference(x, w1, b1, w2, b2))
    assert out.shape == x.shape
    assert jnp.allclose(out, ref, atol=1e-4, rtol=1e-4), "mismatch vs reference (case 2)"

    print("KERNEL_OK")
</pallas_src>

<mosaic_0001>
module attributes {stable_mosaic.version = 11 : i64} {
  func.func @_ffn_kernel(%arg0: i32, %arg1: i32, %arg2: memref<8x4xf32, #tpu.memory_space<vmem>>, %arg3: memref<8x1xf32, #tpu.memory_space<vmem>>, %arg4: memref<4x8xf32, #tpu.memory_space<vmem>>, %arg5: memref<4x1xf32, #tpu.memory_space<vmem>>, %arg6: memref<1x4x128xf32, #tpu.memory_space<vmem>>, %arg7: memref<1x4x128xf32, #tpu.memory_space<vmem>>) attributes {dimension_semantics = [#tpu.dimension_semantics<parallel>, #tpu.dimension_semantics<parallel>], iteration_bounds = array<i64: 2, 2>, scalar_prefetch = 0 : i64, scratch_operands = 0 : i64, tpu.core_type = #tpu.core_type<tc>, window_params = [{pipeline_mode = #tpu.pipeline_mode<synchronous>, transform_indices = @transform_0, window_bounds = array<i64: 8, 4>}, {pipeline_mode = #tpu.pipeline_mode<synchronous>, transform_indices = @transform_1, window_bounds = array<i64: 8, 1>}, {pipeline_mode = #tpu.pipeline_mode<synchronous>, transform_indices = @transform_2, window_bounds = array<i64: 4, 8>}, {pipeline_mode = #tpu.pipeline_mode<synchronous>, transform_indices = @transform_3, window_bounds = array<i64: 4, 1>}, {transform_indices = @transform_4, window_bounds = array<i64: 1, 4, 128>}, {transform_indices = @transform_5, window_bounds = array<i64: 1, 4, 128>}]} {
    %c0 = arith.constant 0 : index
    %c0_0 = arith.constant 0 : index
    %0 = vector.load %arg2[%c0, %c0_0] : memref<8x4xf32, #tpu.memory_space<vmem>>, vector<8x4xf32>
    %c0_1 = arith.constant 0 : index
    %c0_2 = arith.constant 0 : index
    %1 = vector.load %arg3[%c0_1, %c0_2] : memref<8x1xf32, #tpu.memory_space<vmem>>, vector<8x1xf32>
    %c0_3 = arith.constant 0 : index
    %c0_4 = arith.constant 0 : index
    %2 = vector.load %arg4[%c0_3, %c0_4] : memref<4x8xf32, #tpu.memory_space<vmem>>, vector<4x8xf32>
    %c0_5 = arith.constant 0 : index
    %c0_6 = arith.constant 0 : index
    %3 = vector.load %arg5[%c0_5, %c0_6] : memref<4x1xf32, #tpu.memory_space<vmem>>, vector<4x1xf32>
    %c0_7 = arith.constant 0 : index
    %c0_8 = arith.constant 0 : index
    %c0_9 = arith.constant 0 : index
    %4 = vector.load %arg6[%c0_7, %c0_8, %c0_9] : memref<1x4x128xf32, #tpu.memory_space<vmem>>, vector<1x4x128xf32>
    %5 = vector.shape_cast %4 : vector<1x4x128xf32> to vector<4x128xf32>
    %cst = arith.constant dense<0.000000e+00> : vector<8x128xf32>
    %6 = tpu.matmul %0, %5, %cst {dimension_numbers = #tpu.dot_dimension_numbers<[1], [0], [0], [1], [0, 0, 1, 1], [], []>} : vector<8x4xf32>, vector<4x128xf32>, vector<8x128xf32> -> vector<8x128xf32>
    %7 = vector.broadcast %1 : vector<8x1xf32> to vector<8x128xf32>
    %8 = arith.addf %6, %7 : vector<8x128xf32>
    %cst_10 = arith.constant 0.707106769 : f32
    %9 = vector.broadcast %cst_10 : f32 to vector<8x128xf32>
    %10 = arith.mulf %8, %9 : vector<8x128xf32>
    %11 = math.absf %10 : vector<8x128xf32>
    %cst_11 = arith.constant 0.327591091 : f32
    %12 = vector.broadcast %cst_11 : f32 to vector<8x128xf32>
    %13 = arith.mulf %12, %11 : vector<8x128xf32>
    %cst_12 = arith.constant 1.000000e+00 : f32
    %14 = vector.broadcast %cst_12 : f32 to vector<8x128xf32>
    %15 = arith.addf %14, %13 : vector<8x128xf32>
    %16 = tpu.reciprocal %15 {approx = true} : vector<8x128xf32> -> vector<8x128xf32>
    %17 = arith.mulf %15, %16 : vector<8x128xf32>
    %cst_13 = arith.constant 2.000000e+00 : f32
    %18 = vector.broadcast %cst_13 : f32 to vector<8x128xf32>
    %19 = arith.subf %18, %17 : vector<8x128xf32>
    %20 = arith.mulf %16, %19 : vector<8x128xf32>
    %cst_14 = arith.constant 1.06140542 : f32
    %21 = vector.broadcast %cst_14 : f32 to vector<8x128xf32>
    %22 = arith.mulf %21, %20 : vector<8x128xf32>
    %cst_15 = arith.constant -1.45315206 : f32
    %23 = vector.broadcast %cst_15 : f32 to vector<8x128xf32>
    %24 = arith.addf %22, %23 : vector<8x128xf32>
    %25 = arith.mulf %24, %20 : vector<8x128xf32>
    %cst_16 = arith.constant 1.42141378 : f32
    %26 = vector.broadcast %cst_16 : f32 to vector<8x128xf32>
    %27 = arith.addf %25, %26 : vector<8x128xf32>
    %28 = arith.mulf %27, %20 : vector<8x128xf32>
    %cst_17 = arith.constant -0.284496725 : f32
    %29 = vector.broadcast %cst_17 : f32 to vector<8x128xf32>
    %30 = arith.addf %28, %29 : vector<8x128xf32>
    %31 = arith.mulf %30, %20 : vector<8x128xf32>
    %cst_18 = arith.constant 0.254829586 : f32
    %32 = vector.broadcast %cst_18 : f32 to vector<8x128xf32>
    %33 = arith.addf %31, %32 : vector<8x128xf32>
    %34 = arith.mulf %33, %20 : vector<8x128xf32>
    %cst_19 = arith.constant 0.000000e+00 : f32
    %35 = vector.broadcast %cst_19 : f32 to vector<8x128xf32>
    %36 = arith.subf %35, %11 : vector<8x128xf32>
    %37 = arith.mulf %36, %11 : vector<8x128xf32>
    %38 = math.exp %37 : vector<8x128xf32>
    %39 = arith.mulf %34, %38 : vector<8x128xf32>
    %cst_20 = arith.constant 0.000000e+00 : f32
    %40 = vector.broadcast %cst_20 : f32 to vector<8x128xf32>
    %41 = arith.cmpf oge, %10, %40 : vector<8x128xf32>
    %cst_21 = arith.constant 2.000000e+00 : f32
    %42 = vector.broadcast %cst_21 : f32 to vector<8x128xf32>
    %43 = arith.subf %42, %39 : vector<8x128xf32>
    %44 = arith.select %41, %43, %39 : vector<8x128xi1>, vector<8x128xf32>
    %cst_22 = arith.constant 5.000000e-01 : f32
    %45 = vector.broadcast %cst_22 : f32 to vector<8x128xf32>
    %46 = arith.mulf %45, %8 : vector<8x128xf32>
    %47 = arith.mulf %46, %44 : vector<8x128xf32>
    %cst_23 = arith.constant dense<0.000000e+00> : vector<4x128xf32>
    %48 = tpu.matmul %2, %47, %cst_23 {dimension_numbers = #tpu.dot_dimension_numbers<[1], [0], [0], [1], [0, 0, 1, 1], [], []>} : vector<4x8xf32>, vector<8x128xf32>, vector<4x128xf32> -> vector<4x128xf32>
    %49 = vector.broadcast %3 : vector<4x1xf32> to vector<4x128xf32>
    %50 = arith.addf %48, %49 : vector<4x128xf32>
    %c0_24 = arith.constant 0 : index
    %c0_25 = arith.constant 0 : index
    %c0_26 = arith.constant 0 : index
    %51 = vector.load %arg7[%c0_24, %c0_25, %c0_26] : memref<1x4x128xf32, #tpu.memory_space<vmem>>, vector<1x4x128xf32>
    %52 = vector.shape_cast %51 : vector<1x4x128xf32> to vector<4x128xf32>
    %53 = vector.shape_cast %50 : vector<4x128xf32> to vector<1x4x128xf32>
    tpu.vector_store %arg7[%c0_24, %c0_25, %c0_26], %53 {strides = array<i32>} : memref<1x4x128xf32, #tpu.memory_space<vmem>>, vector<1x4x128xf32>,
    return
  }
  func.func @transform_0(%arg0: i32, %arg1: i32) -> (i32, i32) {
    %c0_i32 = arith.constant 0 : i32
    %c0_i32_0 = arith.constant 0 : i32
    %c0_i32_1 = arith.constant 0 : i32
    return %c0_i32, %c0_i32_0 : i32, i32
  }
  func.func @transform_1(%arg0: i32, %arg1: i32) -> (i32, i32) {
    %c0_i32 = arith.constant 0 : i32
    %c0_i32_0 = arith.constant 0 : i32
    %c0_i32_1 = arith.constant 0 : i32
    return %c0_i32, %c0_i32_0 : i32, i32
  }
  func.func @transform_2(%arg0: i32, %arg1: i32) -> (i32, i32) {
    %c0_i32 = arith.constant 0 : i32
    %c0_i32_0 = arith.constant 0 : i32
    %c0_i32_1 = arith.constant 0 : i32
    return %c0_i32, %c0_i32_0 : i32, i32
  }
  func.func @transform_3(%arg0: i32, %arg1: i32) -> (i32, i32) {
    %c0_i32 = arith.constant 0 : i32
    %c0_i32_0 = arith.constant 0 : i32
    %c0_i32_1 = arith.constant 0 : i32
    return %c0_i32, %c0_i32_0 : i32, i32
  }
  func.func @transform_4(%arg0: i32, %arg1: i32) -> (i32, i32, i32) {
    %c0_i32 = arith.constant 0 : i32
    %c0_i32_0 = arith.constant 0 : i32
    return %arg0, %c0_i32, %arg1 : i32, i32, i32
  }
  func.func @transform_5(%arg0: i32, %arg1: i32) -> (i32, i32, i32) {
    %c0_i32 = arith.constant 0 : i32
    %c0_i32_0 = arith.constant 0 : i32
    return %arg0, %c0_i32, %arg1 : i32, i32, i32
  }
}

</mosaic_0001>

<llo_original>
// kernel: tpu_custom_call.1
$region0: #{tpu_custom_call.1}
  #allocation0 [shape = 'u32[]', space=smem, size = 0x4, offset = 0x4, fixed_abs, tag = 'smem constant byte address 0x4 - core index']
  #allocation1 [shape = 'u32[144,128]{1,0:T(1,128)}', space=vmem, size = 0x12000, scoped, tag = 'internal scratch']
  %s0 = inlined_call_operand.vmem [shape: f32[8,4], index: 0, kind: input, shape index: {}]
  %s1 = inlined_call_operand.vmem [shape: f32[8,1], index: 1, kind: input, shape index: {}]
  %s2 = inlined_call_operand.vmem [shape: f32[4,8], index: 2, kind: input, shape index: {}]
  %s3 = inlined_call_operand.vmem [shape: f32[4,1], index: 3, kind: input, shape index: {}]
  %s4 = inlined_call_operand.vmem [shape: f32[2,4,256], index: 4, kind: input, shape index: {}]
  %s5 = inlined_call_operand.hbm [shape: f32[2,4,256], index: 5, kind: output, shape index: {}]
  %s6 = sld [smem:[#allocation0]]
  $region53: #{tpu_custom_call.1} parent=0
    _
  %s8 = ssub.s32 1, %s6
  %s9 = scalar_select 0, %s8, %s6
  $region1: #{tpu_custom_call.1} parent=0
    #allocation2 [shape = 'u8[4096]{0}', space=vmem, size = 0x1000, scoped, tag = 'output window, operand 0']
    #allocation3 [shape = 's32[2]{0}', space=sflag, size = 0x8, scoped, tag = 'scoped memory for tpu_custom_call.1']
    %10 = vsyncpa [#allocation3], 0
    %s11 = scalar_lea.sflag [#allocation3], 1
    %12 = vsyncpa %s11, 0
    loop: start=0, step=1, limit=6
    $region2: #{tpu_custom_call.1} parent=1 // loop_pre_header
      _
    $region3: #{tpu_custom_call.1} parent=1 // loop_header
      %s14 = sphi 0, %s18
      %p15 = scmp.ge.s32.totalorder %s14, 6
      %s21 = sphi 0, %s33
      %s22 = sphi 0, %s29
      %s23 = sphi 0, %s21
      %s24 = sphi 0, %s22
      %s25 = sphi 0, %s23
      %s26 = sphi 0, %s24
      %s34 = sphi 0, %s34
      %s36 = sphi 0, %s34
      %s37 = sphi 0, %s36
      %s51 = sphi 0, %s37
      %s55 = sphi 0, %s55
      %s57 = sphi 0, %s55
      %s58 = sphi 0, %s57
      %s72 = sphi 0, %s58
      %s76 = sphi 0, %s76
      %s78 = sphi 0, %s76
      %s79 = sphi 0, %s78
      %s93 = sphi 0, %s79
      %s97 = sphi 0, %s97
      %s99 = sphi 0, %s97
      %s100 = sphi 0, %s99
      %s114 = sphi 0, %s100
      %s122 = sphi 0, %s124
      %s125 = sphi 0, %s122
      %s126 = sphi 0, %s125
      %s142 = sphi 0, %s126
      %s150 = sphi 0, %s152
      %s153 = sphi 0, %s150
      %s154 = sphi 0, %s153
      %s170 = sphi 0, %s154
    $region4: #{tpu_custom_call.1} parent=1 // loop_header_branch
      %17 = sbr.rel (%p15) target = $region8
    $region5: #{tpu_custom_call.1} parent=1 // loop_body
      %s19 = ssub.s32 %s14, 1
      %s20 = ssub.s32 %s14, 2
      %s27 = sadd.s32 1, %s22
      %p28 = scmp.ge.s32.totalorder %s27, 2
      %s29 = scalar_select %p28, 0, %s27
      %s30 = sadd.s32 1, %s21
      %s31 = scalar_select %p28, %s30, %s21
      %p32 = scmp.ge.s32.totalorder %s31, 2
      %s33 = scalar_select %p32, 0, %s31
      %s35 = sadd.s32 %s34, 1
      %p38 = scmp.eq.s32.totalorder %s14, 3
      %p39 = scmp.ne.s32.totalorder %s34, %s36
      %p40 = scmp.eq.s32.totalorder %s14, 0
      %p41 = por %p39, %p40
      %p42 = scmp.ne.s32.totalorder %s34, %s36
      %p43 = scmp.eq.s32.totalorder %s19, 3
      %p44 = por %p42, %p43
      %p45 = scmp.ne.s32.totalorder %s36, %s37
      %p46 = scmp.eq.s32.totalorder %s19, 0
      %p47 = por %p45, %p46
      %p48 = scmp.ne.s32.totalorder %s36, %s37
      %p49 = scmp.eq.s32.totalorder %s20, 3
      %p50 = por %p48, %p49
      %p52 = scmp.ne.s32.totalorder %s37, %s51
      %p53 = scmp.eq.s32.totalorder %s20, 0
      %p54 = por %p52, %p53
      %s56 = sadd.s32 %s55, 1
      %p59 = scmp.eq.s32.totalorder %s14, 3
      %p60 = scmp.ne.s32.totalorder %s55, %s57
      %p61 = scmp.eq.s32.totalorder %s14, 0
      %p62 = por %p60, %p61
      %p63 = scmp.ne.s32.totalorder %s55, %s57
      %p64 = scmp.eq.s32.totalorder %s19, 3
      %p65 = por %p63, %p64
      %p66 = scmp.ne.s32.totalorder %s57, %s58
      %p67 = scmp.eq.s32.totalorder %s19, 0
      %p68 = por %p66, %p67
      %p69 = scmp.ne.s32.totalorder %s57, %s58
      %p70 = scmp.eq.s32.totalorder %s20, 3
      %p71 = por %p69, %p70
      %p73 = scmp.ne.s32.totalorder %s58, %s72
      %p74 = scmp.eq.s32.totalorder %s20, 0
      %p75 = por %p73, %p74
      %s77 = sadd.s32 %s76, 1
      %p80 = scmp.eq.s32.totalorder %s14, 3
      %p81 = scmp.ne.s32.totalorder %s76, %s78
      %p82 = scmp.eq.s32.totalorder %s14, 0
      %p83 = por %p81, %p82
      %p84 = scmp.ne.s32.totalorder %s76, %s78
      %p85 = scmp.eq.s32.totalorder %s19, 3
      %p86 = por %p84, %p85
      %p87 = scmp.ne.s32.totalorder %s78, %s79
      %p88 = scmp.eq.s32.totalorder %s19, 0
      %p89 = por %p87, %p88
      %p90 = scmp.ne.s32.totalorder %s78, %s79
      %p91 = scmp.eq.s32.totalorder %s20, 3
      %p92 = por %p90, %p91
      %p94 = scmp.ne.s32.totalorder %s79, %s93
      %p95 = scmp.eq.s32.totalorder %s20, 0
      %p96 = por %p94, %p95
      %s98 = sadd.s32 %s97, 1
      %p101 = scmp.eq.s32.totalorder %s14, 3
      %p102 = scmp.ne.s32.totalorder %s97, %s99
      %p103 = scmp.eq.s32.totalorder %s14, 0
      %p104 = por %p102, %p103
      %p105 = scmp.ne.s32.totalorder %s97, %s99
      %p106 = scmp.eq.s32.totalorder %s19, 3
      %p107 = por %p105, %p106
      %p108 = scmp.ne.s32.totalorder %s99, %s100
      %p109 = scmp.eq.s32.totalorder %s19, 0
      %p110 = por %p108, %p109
      %p111 = scmp.ne.s32.totalorder %s99, %s100
      %p112 = scmp.eq.s32.totalorder %s20, 3
      %p113 = por %p111, %p112
      %p115 = scmp.ne.s32.totalorder %s100, %s114
      %p116 = scmp.eq.s32.totalorder %s20, 0
      %p117 = por %p115, %p116
      %s118 = ssub.s32 %s21, %s33
      %s119 = ssub.s32 %s22, %s29
      %s120 = sor.u32 %s118, %s119
      %p121 = scmp.eq.s32.totalorder %s120, 0
      %s123 = sadd.s32 %s122, 1
      %s124 = scalar_select %p121, %s122, %s123
      %p127 = pneg %p121
      %p128 = scmp.eq.s32.totalorder %s14, 3
      %p129 = por %p127, %p128
      %p130 = scmp.ne.s32.totalorder %s122, %s125
      %p131 = scmp.eq.s32.totalorder %s14, 0
      %p132 = por %p130, %p131
      %p133 = scmp.ne.s32.totalorder %s122, %s125
      %p134 = scmp.eq.s32.totalorder %s19, 3
      %p135 = por %p133, %p134
      %p136 = scmp.ne.s32.totalorder %s125, %s126
      %p137 = scmp.eq.s32.totalorder %s19, 0
      %p138 = por %p136, %p137
      %p139 = scmp.ne.s32.totalorder %s125, %s126
      %p140 = scmp.eq.s32.totalorder %s20, 3
      %p141 = por %p139, %p140
      %p143 = scmp.ne.s32.totalorder %s126, %s142
      %p144 = scmp.eq.s32.totalorder %s20, 0
      %p145 = por %p143, %p144
      %s146 = ssub.s32 %s21, %s33
      %s147 = ssub.s32 %s22, %s29
      %s148 = sor.u32 %s146, %s147
      %p149 = scmp.eq.s32.totalorder %s148, 0
      %s151 = sadd.s32 %s150, 1
      %s152 = scalar_select %p149, %s150, %s151
      %p155 = pneg %p149
      %p156 = scmp.eq.s32.totalorder %s14, 3
      %p157 = por %p155, %p156
      %p158 = scmp.ne.s32.totalorder %s150, %s153
      %p159 = scmp.eq.s32.totalorder %s14, 0
      %p160 = por %p158, %p159
      %p161 = scmp.ne.s32.totalorder %s150, %s153
      %p162 = scmp.eq.s32.totalorder %s19, 3
      %p163 = por %p161, %p162
      %p164 = scmp.ne.s32.totalorder %s153, %s154
      %p165 = scmp.eq.s32.totalorder %s19, 0
      %p166 = por %p164, %p165
      %p167 = scmp.ne.s32.totalorder %s153, %s154
      %p168 = scmp.eq.s32.totalorder %s20, 3
      %p169 = por %p167, %p168
      %p171 = scmp.ne.s32.totalorder %s154, %s170
      %p172 = scmp.eq.s32.totalorder %s20, 0
      %p173 = por %p171, %p172
      %p174 = scmp.le.s32.totalorder 1, %s14
      %p175 = scmp.lt.s32.totalorder %s14, 5
      %p176 = pnand %p174, %p175
      %p177 = pneg %p176
      // Predicated region
      $region9: #{tpu_custom_call.1} parent=5 // pred_check
        _
      $region10: #{tpu_custom_call.1} parent=5 // pred_check_branch
        %179 = sbr.rel (%p176) target = $region12
      $region11: #{tpu_custom_call.1} parent=5 // pred_region
        %s180 = ssub.s32 %s14, 1
        // Predicated region
        $region13: #{tpu_custom_call.1} parent=11 // pred_check
          %p181 = pneg %p47
        $region14: #{tpu_custom_call.1} parent=11 // pred_check_branch
          %183 = sbr.rel (%p181) target = $region16
        $region15: #{tpu_custom_call.1} parent=11 // pred_region
          _
        $region16: #{tpu_custom_call.1} parent=11 // pred_fallthru
          _
        // Predicated region
        $region17: #{tpu_custom_call.1} parent=11 // pred_check
          %p184 = pneg %p68
        $region18: #{tpu_custom_call.1} parent=11 // pred_check_branch
          %186 = sbr.rel (%p184) target = $region20
        $region19: #{tpu_custom_call.1} parent=11 // pred_region
          _
        $region20: #{tpu_custom_call.1} parent=11 // pred_fallthru
          _
        // Predicated region
        $region21: #{tpu_custom_call.1} parent=11 // pred_check
          %p187 = pneg %p89
        $region22: #{tpu_custom_call.1} parent=11 // pred_check_branch
          %189 = sbr.rel (%p187) target = $region24
        $region23: #{tpu_custom_call.1} parent=11 // pred_region
          _
        $region24: #{tpu_custom_call.1} parent=11 // pred_fallthru
          _
        // Predicated region
        $region25: #{tpu_custom_call.1} parent=11 // pred_check
          %p190 = pneg %p110
        $region26: #{tpu_custom_call.1} parent=11 // pred_check_branch
          %192 = sbr.rel (%p190) target = $region28
        $region27: #{tpu_custom_call.1} parent=11 // pred_region
          _
        $region28: #{tpu_custom_call.1} parent=11 // pred_fallthru
          _
      $region12: #{tpu_custom_call.1} parent=5 // pred_fallthru
        _
      %p193 = scmp.lt.s32.totalorder %s14, 4
      // Predicated region
      $region29: #{tpu_custom_call.1} parent=5 // pred_check
        %p194 = pneg %p193
      $region30: #{tpu_custom_call.1} parent=5 // pred_check_branch
        %196 = sbr.rel (%p194) target = $region32
      $region31: #{tpu_custom_call.1} parent=5 // pred_region
        // Predicated region
        $region33: #{tpu_custom_call.1} parent=31 // pred_check
          %p197 = pneg %p132
        $region34: #{tpu_custom_call.1} parent=31 // pred_check_branch
          %199 = sbr.rel (%p197) target = $region36
        $region35: #{tpu_custom_call.1} parent=31 // pred_region
          %p200 = scmp.lt.s32.totalorder %s21, 1
          %s201 = scalar_select %p200, %s21, 1
          %p202 = scmp.lt.s32.totalorder %s22, 1
          %s203 = scalar_select %p202, %s22, 1
          %s204 = smul.addr %s201, 2
          %s205 = sadd.s32 %s203, %s204
          %s206 = smul.addr %s205, 4
          %s207 = scalar_lea.vmem %s4, %s206
        $region36: #{tpu_custom_call.1} parent=31 // pred_fallthru
          _
      $region32: #{tpu_custom_call.1} parent=5 // pred_fallthru
        _
      %p208 = scmp.le.s32.totalorder 1, %s14
      %p209 = scmp.lt.s32.totalorder %s14, 5
      %p210 = pnand %p208, %p209
      %p211 = pneg %p210
      // Predicated region
      $region37: #{tpu_custom_call.1} parent=5 // pred_check
        _
      $region38: #{tpu_custom_call.1} parent=5 // pred_check_branch
        %213 = sbr.rel (%p210) target = $region40
      $region39: #{tpu_custom_call.1} parent=5 // pred_region
        %s214 = ssub.s32 %s14, 1
        %p215 = pneg %p47
        %p216 = pneg %p44
        %p217 = pneg %p68
        %p218 = pneg %p65
        %p219 = pneg %p89
        %p220 = pneg %p86
        %p221 = pneg %p110
        %p222 = pneg %p107
        %p223 = scmp.lt.s32.totalorder %s23, 1
        %s224 = scalar_select %p223, %s23, 1
        %p225 = scmp.lt.s32.totalorder %s24, 1
        %s226 = scalar_select %p225, %s24, 1
        %s227 = smul.addr %s224, 2
        %s228 = sadd.s32 %s226, %s227
        %s229 = smul.addr %s228, 4
        %s230 = scalar_lea.vmem %s4, %s229
        %p231 = pneg %p138
        %p232 = pneg %p135
        %p233 = pneg %p166
        %p234 = pneg %p163
        %s235 = sand.u32 %s153, 1
        %s236 = scalar_lea.sflag [#allocation3], %s235
        %s237 = sand.u32 %s153, 1
        %s238 = smul.addr %s237, 4
        %s239 = scalar_lea.vmem [#allocation2], %s238
        %p240 = scmp.lt.s32.totalorder %s23, 1
        %s241 = scalar_select %p240, %s23, 1
        %p242 = scmp.lt.s32.totalorder %s24, 1
        %s243 = scalar_select %p242, %s24, 1
        %s244 = smul.addr %s241, 2
        %s245 = sadd.s32 %s243, %s244
        %s246 = smul.addr %s245, 4
        %s247 = scalar_lea.vmem %s4, %s246
        %v248 = vld [vmem:[%s0] sm:$0xff]
        %v249 = vld [vmem:[%s1] sm:$0xff]
        %v250 = vld [vmem:[%s2] sm:$0xf]
        %v251 = vld [vmem:[%s3] sm:$0xf]
        %v252 = vld [vmem:[%s247] sm:$0xf]
        %254 = vset.pattern.permute.xlu0 0
        %255 = vperm.xlu0 %254, %v249
        %v256 = vpop.permute.xlu0 %255
        %vm258 = vcmask 31744
        %v260 = vsel %vm258, %v248, 0
        %vm262 = vcmask 1043456
        %v264 = vsel %vm262, %v252, 0
        %266 = vmatprep.subr.mxu0 0.0
        %267 = vmatpush1.msra.mxu0 %v264
        %268 = vmatprep.subr.mxu0 0.0
        %269 = vmatpush1.msra.mxu0 0.0
        %270 = vmatprep.subr.mxu0 0.0
        %271 = vmatpush1.msra.mxu0 0.0
        %272 = vmatprep.subr.mxu0 0.0
        %273 = vmatpush1.msra.mxu0 0.0
        %274 = vmatprep.subr.mxu0 0.0
        %275 = vmatpush1.msra.mxu0 0.0
        %276 = vmatprep.subr.mxu0 0.0
        %277 = vmatpush1.msra.mxu0 0.0
        %278 = vmatprep.subr.mxu0 0.0
        %279 = vmatpush1.msra.mxu0 0.0
        %280 = vmatprep.subr.mxu0 0.0
        %281 = vmatpush1.msra.mxu0 0.0
        %282 = vmatprep.subr.mxu0 0.0
        %283 = vmatpush1.msra.mxu0 0.0
        %284 = vmatprep.subr.mxu0 0.0
        %285 = vmatpush1.msra.mxu0 0.0
        %286 = vmatprep.subr.mxu0 0.0
        %287 = vmatpush1.msra.mxu0 0.0
        %288 = vmatprep.subr.mxu0 0.0
        %289 = vmatpush1.msra.mxu0 0.0
        %290 = vmatprep.subr.mxu0 0.0
        %291 = vmatpush1.msra.mxu0 0.0
        %292 = vmatprep.subr.mxu0 0.0
        %293 = vmatpush1.msra.mxu0 0.0
        %294 = vmatprep.subr.mxu0 0.0
        %295 = vmatpush1.msra.mxu0 0.0
        %296 = vmatprep.subr.mxu0 0.0
        %297 = vmatpush1.msra.mxu0 0.0
        %298 = vmatprep.subr.mxu0 0.0
        %299 = vmatpush1.msra.mxu0 0.0
        %300 = vmatprep.subr.mxu0 0.0
        %301 = vmatpush1.msra.mxu0 0.0
        %302 = vmatprep.subr.mxu0 0.0
        %303 = vmatpush1.msra.mxu0 0.0
        %304 = vmatprep.subr.mxu0 0.0
        %305 = vmatpush1.msra.mxu0 0.0
        %306 = vmatprep.subr.mxu0 0.0
        %307 = vmatpush1.msra.mxu0 0.0
        %308 = vmatprep.subr.mxu0 0.0
        %309 = vmatpush1.msra.mxu0 0.0
        %310 = vmatprep.subr.mxu0 0.0
        %311 = vmatpush1.msra.mxu0 0.0
        %312 = vmatprep.subr.mxu0 0.0
        %313 = vmatpush1.msra.mxu0 0.0
        %314 = vmatprep.subr.mxu0 0.0
        %315 = vmatpush1.msra.mxu0 0.0
        %316 = vmatprep.subr.mxu0 0.0
        %317 = vmatpush1.msra.mxu0 0.0
        %318 = vmatprep.subr.mxu0 0.0
        %319 = vmatpush1.msra.mxu0 0.0
        %320 = vmatprep.subr.mxu0 0.0
        %321 = vmatpush1.msra.mxu0 0.0
        %322 = vmatprep.subr.mxu0 0.0
        %323 = vmatpush1.msra.mxu0 0.0
        %324 = vmatprep.subr.mxu0 0.0
        %325 = vmatpush1.msra.mxu0 0.0
        %326 = vmatprep.subr.mxu0 0.0
        %327 = vmatpush1.msra.mxu0 0.0
        %328 = vmatprep.subr.mxu0 0.0
        %329 = vmatpush1.msra.mxu0 0.0
        %330 = vmatprep.mubr.f32.mxu0 0.0
        %331 = vmatmul.mubr.f32.gmra.mrb[0].mxu0 %v260
        %v332 = vpop.f32.mrb[0].mxu0
        %v333 = vadd.f32 %v256, %v332
        %v334 = vpop.f32.mrb[0].mxu0
        %335 = vdwg.mxu0
        %v336 = vmul.f32 %v333, 0.70710677
        %v337 = vand.u32 2147483647, %v336
        %v338 = vmul.f32 %v337, 0.3275911
        %v339 = vadd.f32 %v338, 1.0
        %v340 = vrcp.pop %v339
        %v341 = vmul.f32 %v339, %v340
        %v342 = vsub.f32 2.0, %v341
        %v343 = vmul.f32 %v340, %v342
        %v344 = vmul.f32 %v343, 1.0614054
        %v345 = vadd.f32 %v344, -1.4531521
        %v346 = vmul.f32 %v345, %v343
        %v347 = vadd.f32 %v346, 1.4214138
        %v348 = vmul.f32 %v347, %v343
        %v349 = vadd.f32 %v348, -0.28449672
        %v350 = vmul.f32 %v349, %v343
        %v351 = vadd.f32 %v350, 0.2548296
        %v352 = vmul.f32 %v351, %v343
        %v353 = vsub.f32 0.0, %v337
        %v354 = vmul.f32 %v353, %v337
        %v355 = vmul.f32 %v354, 1.442695
        %v356 = vpow.pop %v355
        %v357 = vmul.f32 %v352, %v356
        %vm358 = vcmp.ge.f32.partialorder %v336, 0.0
        %v359 = vsub.f32 2.0, %v357
        %v360 = vsel %vm358, %v359, %v357
        %v361 = vmul.f32 %v333, 0.5
        %v362 = vmul.f32 %v361, %v360
        %364 = vset.pattern.permute.xlu0 0
        %365 = vperm.xlu0 %364, %v251
        %v366 = vpop.permute.xlu0 %365
        %vm368 = vcmask 64512
        %v370 = vsel %vm368, %v250, 0
        %372 = vmatprep.subr.mxu0 0.0
        %373 = vmatpush1.msra.mxu0 %v362
        %374 = vmatprep.subr.mxu0 0.0
        %375 = vmatpush1.msra.mxu0 0.0
        %376 = vmatprep.subr.mxu0 0.0
        %377 = vmatpush1.msra.mxu0 0.0
        %378 = vmatprep.subr.mxu0 0.0
        %379 = vmatpush1.msra.mxu0 0.0
        %380 = vmatprep.subr.mxu0 0.0
        %381 = vmatpush1.msra.mxu0 0.0
        %382 = vmatprep.subr.mxu0 0.0
        %383 = vmatpush1.msra.mxu0 0.0
        %384 = vmatprep.subr.mxu0 0.0
        %385 = vmatpush1.msra.mxu0 0.0
        %386 = vmatprep.subr.mxu0 0.0
        %387 = vmatpush1.msra.mxu0 0.0
        %388 = vmatprep.subr.mxu0 0.0
        %389 = vmatpush1.msra.mxu0 0.0
        %390 = vmatprep.subr.mxu0 0.0
        %391 = vmatpush1.msra.mxu0 0.0
        %392 = vmatprep.subr.mxu0 0.0
        %393 = vmatpush1.msra.mxu0 0.0
        %394 = vmatprep.subr.mxu0 0.0
        %395 = vmatpush1.msra.mxu0 0.0
        %396 = vmatprep.subr.mxu0 0.0
        %397 = vmatpush1.msra.mxu0 0.0
        %398 = vmatprep.subr.mxu0 0.0
        %399 = vmatpush1.msra.mxu0 0.0
        %400 = vmatprep.subr.mxu0 0.0
        %401 = vmatpush1.msra.mxu0 0.0
        %402 = vmatprep.subr.mxu0 0.0
        %403 = vmatpush1.msra.mxu0 0.0
        %404 = vmatprep.subr.mxu0 0.0
        %405 = vmatpush1.msra.mxu0 0.0
        %406 = vmatprep.subr.mxu0 0.0
        %407 = vmatpush1.msra.mxu0 0.0
        %408 = vmatprep.subr.mxu0 0.0
        %409 = vmatpush1.msra.mxu0 0.0
        %410 = vmatprep.subr.mxu0 0.0
        %411 = vmatpush1.msra.mxu0 0.0
        %412 = vmatprep.subr.mxu0 0.0
        %413 = vmatpush1.msra.mxu0 0.0
        %414 = vmatprep.subr.mxu0 0.0
        %415 = vmatpush1.msra.mxu0 0.0
        %416 = vmatprep.subr.mxu0 0.0
        %417 = vmatpush1.msra.mxu0 0.0
        %418 = vmatprep.subr.mxu0 0.0
        %419 = vmatpush1.msra.mxu0 0.0
        %420 = vmatprep.subr.mxu0 0.0
        %421 = vmatpush1.msra.mxu0 0.0
        %422 = vmatprep.subr.mxu0 0.0
        %423 = vmatpush1.msra.mxu0 0.0
        %424 = vmatprep.subr.mxu0 0.0
        %425 = vmatpush1.msra.mxu0 0.0
        %426 = vmatprep.subr.mxu0 0.0
        %427 = vmatpush1.msra.mxu0 0.0
        %428 = vmatprep.subr.mxu0 0.0
        %429 = vmatpush1.msra.mxu0 0.0
        %430 = vmatprep.subr.mxu0 0.0
        %431 = vmatpush1.msra.mxu0 0.0
        %432 = vmatprep.subr.mxu0 0.0
        %433 = vmatpush1.msra.mxu0 0.0
        %434 = vmatprep.subr.mxu0 0.0
        %435 = vmatpush1.msra.mxu0 0.0
        %436 = vmatprep.mubr.f32.mxu0 0.0
        %437 = vmatmul.mubr.f32.gmra.mrb[0].mxu0 %v370
        %v438 = vpop.f32.mrb[0].mxu0
        %v439 = vadd.f32 %v366, %v438
        %v440 = vpop.f32.mrb[0].mxu0
        %441 = vdwg.mxu0
        %442 = vst [vmem:[%s239] sm:$0xf] %v439
        %s443 = sand.u32 %s153, 1
        %s444 = scalar_lea.sflag [#allocation3], %s443
        %s445 = sand.u32 %s153, 1
        %s446 = smul.addr %s445, 4
        %s447 = scalar_lea.vmem [#allocation2], %s446
        // Predicated region
        $region41: #{tpu_custom_call.1} parent=39 // pred_check
          %p448 = pneg %p163
        $region42: #{tpu_custom_call.1} parent=39 // pred_check_branch
          %450 = sbr.rel (%p448) target = $region44
        $region43: #{tpu_custom_call.1} parent=39 // pred_region
          %s452 = ssub.s32 64, 64
          %453 = vsyncadd %s444, %s452
          %s454 = smul.addr %s23, 2
          %s455 = sadd.s32 %s24, %s454
          %s456 = smul.addr %s455, 64
          %s457 = scalar_lea.hbm %s5, %s456
          %s459 = sshll.u32 %s447, 4
          %s460 = int_to_ptr.vmem [resolvable:$true] %s459
          %462 = dma.vmem_to_hbm [thread:$0]  %s460, 64, %s457, %s444
        $region44: #{tpu_custom_call.1} parent=39 // pred_fallthru
          _
      $region40: #{tpu_custom_call.1} parent=5 // pred_fallthru
        _
      %p463 = scmp.le.s32.totalorder 2, %s14
      // Predicated region
      $region45: #{tpu_custom_call.1} parent=5 // pred_check
        %p464 = pneg %p463
      $region46: #{tpu_custom_call.1} parent=5 // pred_check_branch
        %466 = sbr.rel (%p464) target = $region48
      $region47: #{tpu_custom_call.1} parent=5 // pred_region
        %s467 = ssub.s32 %s14, 2
        // Predicated region
        $region49: #{tpu_custom_call.1} parent=47 // pred_check
          %p468 = pneg %p169
        $region50: #{tpu_custom_call.1} parent=47 // pred_check_branch
          %470 = sbr.rel (%p468) target = $region52
        $region51: #{tpu_custom_call.1} parent=47 // pred_region
          %s471 = sand.u32 %s154, 1
          %s472 = scalar_lea.sflag [#allocation3], %s471
          %s473 = sand.u32 %s154, 1
          %s474 = smul.addr %s473, 4
          %s475 = scalar_lea.vmem [#allocation2], %s474
          %476 = dma.done %s472, 64
        $region52: #{tpu_custom_call.1} parent=47 // pred_fallthru
          _
      $region48: #{tpu_custom_call.1} parent=5 // pred_fallthru
        _
    $region6: #{tpu_custom_call.1} parent=1 // loop_footer
      %s18 = sadd.s32 1, %s14
    $region7: #{tpu_custom_call.1} parent=1 // loop_footer_branch
      %13 = sbr.rel target = $region3
    $region8: #{tpu_custom_call.1} parent=1 // loop_exit
      _
    %477 = vsyncpa [#allocation3], 1
    %s478 = scalar_lea.sflag [#allocation3], 1
    %479 = vsyncpa %s478, 1

</llo_original>
